<compile_context>
chip_gen: v7x
topology: tpu7x:2x2x1
jax: 0.10.0
libtpu: 0.0.40
codegen_flags: <defaults>
</compile_context>

<pallas_src>
import functools

import jax
import jax.numpy as jnp
from jax.experimental import pallas as pl
from jax.experimental.pallas import tpu as pltpu


def _bce_kernel(*refs, n, k, tm, tk, weighted, mask_rows, mask_cols):
    """Masked, (optionally) weighted BCE partial sum for one row tile."""
    if weighted:
        out_ref, tgt_ref, w_ref, part_ref, acc_ref = refs
    else:
        out_ref, tgt_ref, part_ref, acc_ref = refs
        w_ref = None

    j = pl.program_id(1)

    # Zero the per-row-tile accumulator at the start of each column sweep.
    @pl.when(j == 0)
    def _init():
        acc_ref[...] = jnp.zeros_like(acc_ref)

    # Native-dtype DMA, f32 math in-kernel.
    p = out_ref[...].astype(jnp.float32)
    t = tgt_ref[...].astype(jnp.float32)

    # PyTorch F.binary_cross_entropy clamps each log term at -100.
    log_p = jnp.maximum(jnp.log(p), -100.0)
    log_1mp = jnp.maximum(jnp.log(1.0 - p), -100.0)
    loss = -(t * log_p + (1.0 - t) * log_1mp)

    if weighted:
        # (tm, 1) row weights broadcast over lanes, or full (tm, tk) weights.
        loss = loss * w_ref[...].astype(jnp.float32)

    if mask_rows or mask_cols:
        valid = None
        if mask_rows:
            i = pl.program_id(0)
            rows = i * tm + jax.lax.broadcasted_iota(jnp.int32, (tm, tk), 0)
            valid = rows < n
        if mask_cols:
            cols = j * tk + jax.lax.broadcasted_iota(jnp.int32, (tm, tk), 1)
            cmask = cols < k
            valid = cmask if valid is None else (valid & cmask)
        loss = jnp.where(valid, loss, 0.0)

    acc_ref[...] = acc_ref[...] + jnp.sum(loss)

    # Single scalar store per row tile, only at the last column step.
    @pl.when(j == pl.num_programs(1) - 1)
    def _finalize():
        part_ref[...] = acc_ref[...]


def bce_loss(output, target, target_weight=None, *,
             use_target_weight=False, loss_weight=1.0):
    """JAX/Pallas equivalent of the PyTorch BCELoss module's forward."""
    assert output.ndim == 2 and output.shape == target.shape
    n, k = output.shape

    # Tile selection: use full dims when small (always layout-legal), else a
    # conservative tile that fits every TPU generation's scoped VMEM.
    TM_MAX, TK_MAX = 256, 512
    tm = n if n <= TM_MAX else TM_MAX
    tk = k if k <= TK_MAX else TK_MAX
    grid_rows = pl.cdiv(n, tm)
    grid_cols = pl.cdiv(k, tk)
    mask_rows = n % tm != 0
    mask_cols = k % tk != 0

    in_specs = [
        pl.BlockSpec((tm, tk), lambda i, j: (i, j)),
        pl.BlockSpec((tm, tk), lambda i, j: (i, j)),
    ]
    args = [output, target]

    weighted = False
    if use_target_weight:
        assert target_weight is not None
        tw = jnp.asarray(target_weight)
        if tw.ndim == 1:
            tw = tw[:, None]
        if tw.shape == (n, 1):
            in_specs.append(pl.BlockSpec((tm, 1), lambda i, j: (i, 0)))
        elif tw.shape == (n, k):
            in_specs.append(pl.BlockSpec((tm, tk), lambda i, j: (i, j)))
        else:
            raise ValueError(
                f"target_weight must be [N], [N,1] or [N,K]; got {tw.shape}")
        weighted = True
        args.append(tw)

    kernel = functools.partial(
        _bce_kernel, n=n, k=k, tm=tm, tk=tk,
        weighted=weighted, mask_rows=mask_rows, mask_cols=mask_cols)

    partials = pl.pallas_call(
        kernel,
        out_shape=jax.ShapeDtypeStruct((grid_rows, 1), jnp.float32),
        grid_spec=pltpu.PrefetchScalarGridSpec(
            num_scalar_prefetch=0,
            grid=(grid_rows, grid_cols),
            in_specs=in_specs,
            out_specs=pl.BlockSpec((1, 1), lambda i, j: (i, 0)),
            scratch_shapes=[pltpu.VMEM((1, 1), jnp.float32)],
        ),
        compiler_params=pltpu.CompilerParams(
            dimension_semantics=("parallel", "arbitrary")),
    )(*args)

    # Tiny finalize on (grid_rows, 1): mean over the true N*K + loss_weight.
    return jnp.sum(partials) * (jnp.float32(loss_weight) / jnp.float32(n * k))


def _reference_bce(output, target, target_weight=None,
                   use_target_weight=False, loss_weight=1.0):
    output = output.astype(jnp.float32)
    target = target.astype(jnp.float32)
    log_p = jnp.maximum(jnp.log(output), -100.0)
    log_1mp = jnp.maximum(jnp.log(1.0 - output), -100.0)
    loss = -(target * log_p + (1.0 - target) * log_1mp)
    if use_target_weight:
        tw = jnp.asarray(target_weight).astype(jnp.float32)
        if tw.ndim == 1:
            tw = tw[:, None]
        loss = loss * tw
    return jnp.mean(loss) * loss_weight


def _check(a, b):
    assert jnp.allclose(a, b, atol=1e-6, rtol=1e-4), (a, b)


if __name__ == "__main__":
    key = jax.random.PRNGKey(0)
    k1, k2, k3, k4, k5, k6 = jax.random.split(key, 6)

    # --- case set A: small shapes, single tile (N=8 batch, K=32 labels) ---
    N, K = 8, 32
    output = jax.nn.sigmoid(jax.random.normal(k1, (N, K), dtype=jnp.float32))
    target = jax.random.bernoulli(k2, 0.5, (N, K)).astype(jnp.float32)
    tw_row = jax.random.uniform(k3, (N,), dtype=jnp.float32)
    tw_full = jax.random.uniform(k3, (N, K), dtype=jnp.float32)

    loss_plain = bce_loss(output, target)
    jax.block_until_ready(loss_plain)
    _check(loss_plain, _reference_bce(output, target))

    loss_row = bce_loss(output, target, tw_row,
                        use_target_weight=True, loss_weight=2.0)
    jax.block_until_ready(loss_row)
    _check(loss_row, _reference_bce(output, target, tw_row,
                                    use_target_weight=True, loss_weight=2.0))

    loss_full = bce_loss(output, target, tw_full,
                         use_target_weight=True, loss_weight=0.5)
    jax.block_until_ready(loss_full)
    _check(loss_full, _reference_bce(output, target, tw_full,
                                     use_target_weight=True, loss_weight=0.5))

    # --- case set B: exercises column tiling + remainder masking (K=600>512) ---
    N2, K2 = 40, 600
    output2 = jax.nn.sigmoid(jax.random.normal(k4, (N2, K2), dtype=jnp.float32))
    target2 = jax.random.bernoulli(k5, 0.5, (N2, K2)).astype(jnp.float32)
    tw2 = jax.random.uniform(k6, (N2,), dtype=jnp.float32)

    loss2_plain = bce_loss(output2, target2)
    jax.block_until_ready(loss2_plain)
    _check(loss2_plain, _reference_bce(output2, target2))

    loss2_row = bce_loss(output2, target2, tw2,
                         use_target_weight=True, loss_weight=3.0)
    jax.block_until_ready(loss2_row)
    _check(loss2_row, _reference_bce(output2, target2, tw2,
                                     use_target_weight=True, loss_weight=3.0))

    print("KERNEL_OK")
</pallas_src>

<mosaic_0001>
module attributes {stable_mosaic.version = 11 : i64} {
  func.func @_bce_kernel(%arg0: i32, %arg1: i32, %arg2: memref<8x32xf32, #tpu.memory_space<vmem>>, %arg3: memref<8x32xf32, #tpu.memory_space<vmem>>, %arg4: memref<1x1xf32, #tpu.memory_space<vmem>>, %arg5: memref<1x1xf32, #tpu.memory_space<vmem>>) attributes {dimension_semantics = [#tpu.dimension_semantics<parallel>, #tpu.dimension_semantics<arbitrary>], iteration_bounds = array<i64: 1, 1>, scalar_prefetch = 0 : i64, scratch_operands = 1 : i64, tpu.core_type = #tpu.core_type<tc>, window_params = [{transform_indices = @transform_0, window_bounds = array<i64: 8, 32>}, {transform_indices = @transform_1, window_bounds = array<i64: 8, 32>}, {transform_indices = @transform_2, window_bounds = array<i64: 1, 1>}]} {
    %c0_i32 = arith.constant 0 : i32
    %0 = arith.cmpi eq, %arg1, %c0_i32 : i32
    %1 = arith.extui %0 : i1 to i32
    %c0_i32_0 = arith.constant 0 : i32
    %2 = arith.cmpi ne, %1, %c0_i32_0 : i32
    scf.if %2 {
      %cst_15 = arith.constant 0.000000e+00 : f32
      %31 = vector.broadcast %cst_15 : f32 to vector<1x1xf32>
      %c0_16 = arith.constant 0 : index
      %c0_17 = arith.constant 0 : index
      %32 = vector.load %arg5[%c0_16, %c0_17] : memref<1x1xf32, #tpu.memory_space<vmem>>, vector<1x1xf32>
      tpu.vector_store %arg5[%c0_16, %c0_17], %31 {strides = array<i32>} : memref<1x1xf32, #tpu.memory_space<vmem>>, vector<1x1xf32>,
    } else {
    }
    %c0 = arith.constant 0 : index
    %c0_1 = arith.constant 0 : index
    %3 = vector.load %arg2[%c0, %c0_1] : memref<8x32xf32, #tpu.memory_space<vmem>>, vector<8x32xf32>
    %c0_2 = arith.constant 0 : index
    %c0_3 = arith.constant 0 : index
    %4 = vector.load %arg3[%c0_2, %c0_3] : memref<8x32xf32, #tpu.memory_space<vmem>>, vector<8x32xf32>
    %5 = math.log %3 : vector<8x32xf32>
    %cst = arith.constant -1.000000e+02 : f32
    %6 = vector.broadcast %cst : f32 to vector<8x32xf32>
    %7 = arith.maximumf %5, %6 : vector<8x32xf32>
    %cst_4 = arith.constant 1.000000e+00 : f32
    %8 = vector.broadcast %cst_4 : f32 to vector<8x32xf32>
    %9 = arith.subf %8, %3 : vector<8x32xf32>
    %10 = math.log %9 : vector<8x32xf32>
    %cst_5 = arith.constant -1.000000e+02 : f32
    %11 = vector.broadcast %cst_5 : f32 to vector<8x32xf32>
    %12 = arith.maximumf %10, %11 : vector<8x32xf32>
    %13 = arith.mulf %4, %7 : vector<8x32xf32>
    %cst_6 = arith.constant 1.000000e+00 : f32
    %14 = vector.broadcast %cst_6 : f32 to vector<8x32xf32>
    %15 = arith.subf %14, %4 : vector<8x32xf32>
    %16 = arith.mulf %15, %12 : vector<8x32xf32>
    %17 = arith.addf %13, %16 : vector<8x32xf32>
    %cst_7 = arith.constant 0.000000e+00 : f32
    %18 = vector.broadcast %cst_7 : f32 to vector<8x32xf32>
    %19 = arith.subf %18, %17 : vector<8x32xf32>
    %c0_8 = arith.constant 0 : index
    %c0_9 = arith.constant 0 : index
    %20 = vector.load %arg5[%c0_8, %c0_9] : memref<1x1xf32, #tpu.memory_space<vmem>>, vector<1x1xf32>
    %21 = vector.shape_cast %19 : vector<8x32xf32> to vector<1x8x32xf32>
    %cst_10 = arith.constant dense<0.000000e+00> : vector<1xf32>
    %22 = vector.multi_reduction <add>, %21, %cst_10 [1, 2] : vector<1x8x32xf32> to vector<1xf32>
    %23 = vector.shape_cast %22 : vector<1xf32> to vector<1x1x1xf32>
    %24 = vector.extract %23[0, 0, 0] : f32 from vector<1x1x1xf32>
    %25 = vector.broadcast %24 : f32 to vector<1x1xf32>
    %26 = arith.addf %20, %25 : vector<1x1xf32>
    %c0_11 = arith.constant 0 : index
    %c0_12 = arith.constant 0 : index
    %27 = vector.load %arg5[%c0_11, %c0_12] : memref<1x1xf32, #tpu.memory_space<vmem>>, vector<1x1xf32>
    tpu.vector_store %arg5[%c0_11, %c0_12], %26 {strides = array<i32>} : memref<1x1xf32, #tpu.memory_space<vmem>>, vector<1x1xf32>,
    %c0_i32_13 = arith.constant 0 : i32
    %28 = arith.cmpi eq, %arg1, %c0_i32_13 : i32
    %29 = arith.extui %28 : i1 to i32
    %c0_i32_14 = arith.constant 0 : i32
    %30 = arith.cmpi ne, %29, %c0_i32_14 : i32
    scf.if %30 {
      %c0_15 = arith.constant 0 : index
      %c0_16 = arith.constant 0 : index
      %31 = vector.load %arg5[%c0_15, %c0_16] : memref<1x1xf32, #tpu.memory_space<vmem>>, vector<1x1xf32>
      %c0_17 = arith.constant 0 : index
      %c0_18 = arith.constant 0 : index
      %32 = vector.load %arg4[%c0_17, %c0_18] : memref<1x1xf32, #tpu.memory_space<vmem>>, vector<1x1xf32>
      tpu.vector_store %arg4[%c0_17, %c0_18], %31 {strides = array<i32>} : memref<1x1xf32, #tpu.memory_space<vmem>>, vector<1x1xf32>,
    } else {
    }
    return
  }
  func.func @transform_0(%arg0: i32, %arg1: i32) -> (i32, i32) {
    %c0_i32 = arith.constant 0 : i32
    return %arg0, %arg1 : i32, i32
  }
  func.func @transform_1(%arg0: i32, %arg1: i32) -> (i32, i32) {
    %c0_i32 = arith.constant 0 : i32
    return %arg0, %arg1 : i32, i32
  }
  func.func @transform_2(%arg0: i32, %arg1: i32) -> (i32, i32) {
    %c0_i32 = arith.constant 0 : i32
    %c0_i32_0 = arith.constant 0 : i32
    return %arg0, %c0_i32 : i32, i32
  }
}

</mosaic_0001>

<llo_original>
// kernel: tpu_custom_call.1
$region0: #{tpu_custom_call.1}
  #allocation0 [shape = 'u32[]', space=smem, size = 0x4, offset = 0x4, fixed_abs, tag = 'smem constant byte address 0x4 - core index']
  #allocation1 [shape = 'u32[144,128]{1,0:T(1,128)}', space=vmem, size = 0x12000, scoped, tag = 'internal scratch']
  #allocation2 [shape = 'f32[1,1]{1,0:T(1,128)}', space=vmem, size = 0x200, scoped, tag = 'scratch operand']
  %s0 = inlined_call_operand.hbm [shape: f32[8,32], index: 0, kind: input, shape index: {}]
  %s1 = inlined_call_operand.hbm [shape: f32[8,32], index: 1, kind: input, shape index: {}]
  %s2 = inlined_call_operand.hbm [shape: f32[1,1], index: 2, kind: output, shape index: {}]
  %s3 = sld [smem:[#allocation0]]
  $region34: #{tpu_custom_call.1} parent=0
    _
  %s5 = ssub.s32 1, %s3
  %s6 = scalar_select 0, %s5, %s3
  $region1: #{tpu_custom_call.1} parent=0
    #allocation3 [shape = 'u8[4096]{0}', space=vmem, size = 0x1000, scoped, tag = 'input window, operand 0, single buffered']
    #allocation4 [shape = 's32[1]{0}', space=sflag, size = 0x4, scoped, tag = 'scoped memory for tpu_custom_call.1']
    #allocation5 [shape = 's32[1]{0}', space=sflag, size = 0x4, scoped, tag = 'scoped memory for tpu_custom_call.1']
    #allocation6 [shape = 'u8[4096]{0}', space=vmem, size = 0x1000, scoped, tag = 'input window, operand 1, single buffered']
    #allocation7 [shape = 's32[1]{0}', space=sflag, size = 0x4, scoped, tag = 'scoped memory for tpu_custom_call.1']
    #allocation8 [shape = 'u8[512]{0}', space=vmem, size = 0x400, scoped, tag = 'output window, operand 0, single buffered']
    %7 = vsyncpa [#allocation4], 0
    %8 = vsyncpa [#allocation7], 0
    %9 = vsyncpa [#allocation5], 0
    // Predicated region
    $region2: #{tpu_custom_call.1} parent=1 // pred_check
      _
    $region3: #{tpu_custom_call.1} parent=1 // pred_check_branch
      %11 = sbr.rel (0) target = $region5
    $region4: #{tpu_custom_call.1} parent=1 // pred_region
      %s13 = ssub.s32 128, 128
      %14 = vsyncadd [#allocation4], %s13
      %s16 = sshll.u32 [#allocation3], 4
      %s17 = int_to_ptr.vmem [resolvable:$true] %s16
      %19 = dma.hbm_to_vmem [thread:$0]  %s0, 128, %s17, [#allocation4]
    $region5: #{tpu_custom_call.1} parent=1 // pred_fallthru
      _
    // Predicated region
    $region6: #{tpu_custom_call.1} parent=1 // pred_check
      _
    $region7: #{tpu_custom_call.1} parent=1 // pred_check_branch
      %21 = sbr.rel (0) target = $region9
    $region8: #{tpu_custom_call.1} parent=1 // pred_region
      %s23 = ssub.s32 128, 128
      %24 = vsyncadd [#allocation7], %s23
      %s26 = sshll.u32 [#allocation6], 4
      %s27 = int_to_ptr.vmem [resolvable:$true] %s26
      %29 = dma.hbm_to_vmem [thread:$0]  %s1, 128, %s27, [#allocation7]
    $region9: #{tpu_custom_call.1} parent=1 // pred_fallthru
      _
    // Predicated region
    $region10: #{tpu_custom_call.1} parent=1 // pred_check
      _
    $region11: #{tpu_custom_call.1} parent=1 // pred_check_branch
      %31 = sbr.rel (0) target = $region13
    $region12: #{tpu_custom_call.1} parent=1 // pred_region
      %32 = dma.done [#allocation4], 128
    $region13: #{tpu_custom_call.1} parent=1 // pred_fallthru
      _
    // Predicated region
    $region14: #{tpu_custom_call.1} parent=1 // pred_check
      _
    $region15: #{tpu_custom_call.1} parent=1 // pred_check_branch
      %34 = sbr.rel (0) target = $region17
    $region16: #{tpu_custom_call.1} parent=1 // pred_region
      %35 = dma.done [#allocation7], 128
    $region17: #{tpu_custom_call.1} parent=1 // pred_fallthru
      _
    %p36 = scmp.eq.s32.totalorder 0, 0
    // Predicated region
    $region18: #{tpu_custom_call.1} parent=1 // pred_check
      %p37 = pneg %p36
    $region19: #{tpu_custom_call.1} parent=1 // pred_check_branch
      %39 = sbr.rel (%p37) target = $region21
    $region20: #{tpu_custom_call.1} parent=1 // pred_region
      %vm40 = vcmask 0
      %41 = vst.msk [vmem:[#allocation2] sm:$0x1] %vm40, 0.0
    $region21: #{tpu_custom_call.1} parent=1 // pred_fallthru
      _
    %v42 = vld [vmem:[#allocation3] sm:$0xff]
    %v43 = vld [vmem:[#allocation6] sm:$0xff]
    %v44 = vlog2.pop %v42
    %v45 = vmul.f32 %v44, 0.6931472
    %v46 = vmax.f32 %v45, -100.0
    %v47 = vsub.f32 1.0, %v42
    %v48 = vlog2.pop %v47
    %v49 = vmul.f32 %v48, 0.6931472
    %v50 = vmax.f32 %v49, -100.0
    %v51 = vmul.f32 %v43, %v46
    %v52 = vsub.f32 1.0, %v43
    %v53 = vmul.f32 %v52, %v50
    %v54 = vadd.f32 %v51, %v53
    %v55 = vsub.f32 0.0, %v54
    %v56 = vld [vmem:[#allocation2] sm:$0x1]
    %vm57 = vcmask 261120
    %v58 = vsel %vm57, %v55, 0.0
    %59 = vadd.xlane.f32.xlu0 %v58
    %v60 = vpop.xlane.xlu0 %59
    %v61 = vrot.slane %v60, 4
    %v62 = vadd.f32 %v60, %v61
    %v63 = vrot.slane %v62, 2
    %v64 = vadd.f32 %v62, %v63
    %v65 = vrot.slane %v64, 1
    %v66 = vadd.f32 %v64, %v65
    %s67 = vtos %v66
    %v68 = vstv %s67
    %v69 = vadd.f32 %v56, %v68
    %vm70 = vcmask 0
    %71 = vst.msk [vmem:[#allocation2] sm:$0x1] %vm70, %v69
    // Predicated region
    $region22: #{tpu_custom_call.1} parent=1 // pred_check
      %p72 = pneg %p36
    $region23: #{tpu_custom_call.1} parent=1 // pred_check_branch
      %74 = sbr.rel (%p72) target = $region25
    $region24: #{tpu_custom_call.1} parent=1 // pred_region
      %v75 = vld [vmem:[#allocation2] sm:$0x1]
      %76 = vst.msk [vmem:[#allocation8] sm:$0x1] %vm70, %v75
    $region25: #{tpu_custom_call.1} parent=1 // pred_fallthru
      _
    // Predicated region
    $region26: #{tpu_custom_call.1} parent=1 // pred_check
      _
    $region27: #{tpu_custom_call.1} parent=1 // pred_check_branch
      %78 = sbr.rel (0) target = $region29
    $region28: #{tpu_custom_call.1} parent=1 // pred_region
      %s80 = ssub.s32 16, 16
      %81 = vsyncadd [#allocation5], %s80
      %s83 = sshll.u32 [#allocation8], 4
      %s84 = int_to_ptr.vmem [resolvable:$true] %s83
      %86 = dma.vmem_to_hbm [thread:$0]  %s84, 16, %s2, [#allocation5]
    $region29: #{tpu_custom_call.1} parent=1 // pred_fallthru
      _
    // Predicated region
    $region30: #{tpu_custom_call.1} parent=1 // pred_check
      _
    $region31: #{tpu_custom_call.1} parent=1 // pred_check_branch
      %88 = sbr.rel (0) target = $region33
    $region32: #{tpu_custom_call.1} parent=1 // pred_region
      %89 = dma.done [#allocation5], 16
    $region33: #{tpu_custom_call.1} parent=1 // pred_fallthru
      _
    %90 = vsyncpa [#allocation4], 1
    %91 = vsyncpa [#allocation7], 1
    %92 = vsyncpa [#allocation5], 1

</llo_original>
